<compile_context>
chip_gen: v6e
topology: v6e:2x2x1
jax: 0.10.0
libtpu: 0.0.40
codegen_flags: <defaults>
</compile_context>

<pallas_src>
import functools
import math

import jax
import jax.numpy as jnp
from jax.experimental import pallas as pl
from jax.experimental.pallas import tpu as pltpu

LANE = 128
SUBLANE = 8


def _round_up(x, m):
    return (x + m - 1) // m * m


# --------------------------------------------------------------------------- #
# Pallas kernel: whole MLP fused, activations stay on-chip
# --------------------------------------------------------------------------- #
def _fused_mlp_kernel(desc_ref, dose_ref, *refs, relu_flags):
    """Fused MLP over one batch tile.

    desc_ref : (TILE_B, Dd)  f32   descriptor tile (pipelined)
    dose_ref : (TILE_B, 1)   f32   dosage tile (pipelined)
    refs     : (w0a, w0b, s0, w1, s1, ..., w_{L-1}, s_{L-1}, o_ref)
               w* are bf16 (folded W*scale), s* are f32 (folded b*scale+shift),
               o_ref is (TILE_B, output_dim) f32 -- true-width output.
    Layer 0 is split: concat([desc, dose]) @ W0  ==  desc @ W0a + dose * w0b
    (the dosage K=1 'matmul' is a cheap VPU broadcast-multiply).
    """
    o_ref = refs[-1]
    w0a_ref, w0b_ref, s0_ref = refs[0], refs[1], refs[2]
    rest = refs[3:-1]  # (w, s) pairs for the remaining layers

    # Layer 0: MXU on the descriptor block, VPU for the dosage column.
    h = jnp.dot(desc_ref[...].astype(jnp.bfloat16), w0a_ref[...],
                preferred_element_type=jnp.float32)
    h = h + dose_ref[...] * w0b_ref[...].astype(jnp.float32)   # (B,1)*(1,P) bcast
    h = h + s0_ref[...]
    if relu_flags[0]:
        h = jnp.maximum(h, 0.0)

    n_rest = len(rest) // 2
    for l in range(n_rest):                     # static Python loop -> unrolled
        w_ref, s_ref = rest[2 * l], rest[2 * l + 1]
        h = jnp.dot(h.astype(jnp.bfloat16), w_ref[...],
                    preferred_element_type=jnp.float32) + s_ref[...]
        if relu_flags[l + 1]:
            h = jnp.maximum(h, 0.0)

    o_ref[...] = h.astype(o_ref.dtype)          # true-width (masked) store


def _pick_tile_b(batch, bytes_per_row):
    """Batch-tile size: big tiles to amortize per-step overhead, >=2 grid steps
    for mid-size batches (v7x megacore), capped so the double-buffered in/out
    streams stay well inside scoped VMEM."""
    budget = 8 * 1024 * 1024                       # ~8 MiB of streamed rows/step
    cap = (budget // max(bytes_per_row, 1)) // SUBLANE * SUBLANE
    cap = max(SUBLANE, min(2048, cap))
    if batch <= 2 * SUBLANE:
        return batch                               # single full-array block
    if batch <= 2 * cap:
        return _round_up(pl.cdiv(batch, 2), SUBLANE)   # >= 2 grid steps
    return cap


def fused_encoder_forward(descriptors, dosage, packed):
    """descriptors: (B, descriptor_dim) f32, dosage: (B, 1) f32 -> (B, output_dim) f32."""
    B, Dd = descriptors.shape
    out_dim = packed["output_dim"]
    params = packed["params"]

    bytes_per_row = 4 * (Dd + 1 + out_dim)
    tile_b = _pick_tile_b(B, bytes_per_row)
    grid = (pl.cdiv(B, tile_b),)                   # ragged last block handled by Pallas

    in_specs = [
        pl.BlockSpec((tile_b, Dd), lambda i: (i, 0)),   # descriptors tile (pipelined)
        pl.BlockSpec((tile_b, 1), lambda i: (i, 0)),    # dosage tile (pipelined)
    ]
    for p in params:
        # Full-array block, constant index -> fetched once, stays resident.
        # TODO(synk): pipeline_mode=pl.Buffered(1) to drop the second resident
        # copy once weight stacks get large relative to VMEM (v7x).
        in_specs.append(pl.BlockSpec(p.shape, lambda i: (0, 0)))

    out_spec = pl.BlockSpec((tile_b, out_dim), lambda i: (i, 0))  # true width

    flops = int(sum(2 * B * din * dout for din, dout in packed["true_dims"]))
    bytes_accessed = int(
        descriptors.size * descriptors.dtype.itemsize
        + dosage.size * dosage.dtype.itemsize
        + sum(int(p.size) * p.dtype.itemsize for p in params)
        + B * out_dim * 4)

    kernel = functools.partial(_fused_mlp_kernel, relu_flags=packed["relu_flags"])
    out = pl.pallas_call(
        kernel,
        out_shape=jax.ShapeDtypeStruct((B, out_dim), jnp.float32),
        grid=grid,
        in_specs=in_specs,
        out_specs=out_spec,
        compiler_params=pltpu.CompilerParams(
            dimension_semantics=("parallel",),          # megacore over batch tiles
            vmem_limit_bytes=64 * 1024 * 1024,
        ),
        cost_estimate=pl.CostEstimate(
            flops=flops, transcendentals=0, bytes_accessed=bytes_accessed),
    )(descriptors.astype(jnp.float32), dosage.astype(jnp.float32), *params)
    return out


# --------------------------------------------------------------------------- #
# Parameter construction (PyTorch-like init) + folding / padding / packing
# --------------------------------------------------------------------------- #
def init_encoder_params(key, input_dim, hidden_dims, output_dim,
                        normalize=True, eps=1e-5):
    """Raw per-layer params: Linear (PyTorch uniform init) + BatchNorm1d at init.

    Returns list of {'w' (in,out), 'b' (out,), 'scale' (out,), 'shift' (out,), 'relu'}.
    scale/shift are the eval-mode BN affine (identity when normalize=False or
    for the final Linear).
    """
    layers = []
    prev = input_dim
    dims = list(hidden_dims) + [output_dim]
    for i, d in enumerate(dims):
        key, kw, kb = jax.random.split(key, 3)
        bound = 1.0 / math.sqrt(prev)
        w = jax.random.uniform(kw, (prev, d), jnp.float32, -bound, bound)
        b = jax.random.uniform(kb, (d,), jnp.float32, -bound, bound)
        is_hidden = i < len(hidden_dims)
        if is_hidden and normalize:
            gamma = jnp.ones((d,), jnp.float32)
            beta = jnp.zeros((d,), jnp.float32)
            run_mean = jnp.zeros((d,), jnp.float32)
            run_var = jnp.ones((d,), jnp.float32)
            scale = gamma / jnp.sqrt(run_var + eps)
            shift = beta - run_mean * scale
        else:
            scale = jnp.ones((d,), jnp.float32)
            shift = jnp.zeros((d,), jnp.float32)
        layers.append({"w": w, "b": b, "scale": scale, "shift": shift,
                       "relu": is_hidden})
        prev = d
    return layers


def pack_params(layers, descriptor_dim, compute_dtype=jnp.bfloat16):
    """Fold bias + eval-BN into the weights, lane-pad each layer AT ITS OWN
    width, split layer 0 into (descriptor, dosage) parts, cast weights to bf16.

    Padding invariant (required for correctness): padded output lanes carry
    zero weight AND zero shift, and the activation satisfies f(0)==0 (ReLU),
    so padded lanes stay exactly 0 through every hidden layer; the final layer
    is emitted at true output_dim so padding never reaches the output.
    """
    L = len(layers)
    weights, shifts, relu_flags, true_dims = [], [], [], []
    prev_pad = None
    for idx, l in enumerate(layers):
        din, dout = l["w"].shape
        true_dims.append((din, dout))
        is_last = idx == L - 1
        dout_pad = dout if is_last else _round_up(dout, LANE)
        din_pad = din if idx == 0 else prev_pad
        w_fold = l["w"] * l["scale"][None, :]            # W' = W * scale
        s_fold = l["b"] * l["scale"] + l["shift"]        # shift' = b*scale + shift
        w_pad = jnp.zeros((din_pad, dout_pad), jnp.float32).at[:din, :dout].set(w_fold)
        s_pad = jnp.zeros((1, dout_pad), jnp.float32).at[0, :dout].set(s_fold)
        assert l["relu"] or is_last, "padding invariant assumes f(0)==0 activations"
        weights.append(w_pad.astype(compute_dtype))      # bf16 MXU feed
        shifts.append(s_pad)                             # f32: added to f32 accumulator
        relu_flags.append(bool(l["relu"]))
        prev_pad = dout_pad

    # Split layer 0 into descriptor rows and the dosage row (concat integration).
    w0 = weights[0]
    assert w0.shape[0] == descriptor_dim + 1
    w0a = w0[:descriptor_dim]                            # (Dd, P1)
    w0b = w0[descriptor_dim:descriptor_dim + 1]          # (1, P1)
    params = [w0a, w0b, shifts[0]]
    for w, s in zip(weights[1:], shifts[1:]):
        params += [w, s]

    return {
        "params": tuple(params),
        "relu_flags": tuple(relu_flags),
        "true_dims": tuple(true_dims),
        "output_dim": layers[-1]["w"].shape[1],
    }


# --------------------------------------------------------------------------- #
# IntegratedMolecularEncoder forward (dosage_integration='concat', eval mode)
# --------------------------------------------------------------------------- #
def integrated_molecular_encoder(descriptors, dosage, packed):
    return fused_encoder_forward(descriptors, dosage, packed)


# --------------------------------------------------------------------------- #
# Demo / smoke test
# --------------------------------------------------------------------------- #
if __name__ == "__main__":
    key = jax.random.PRNGKey(0)
    k_desc, k_dose, k_params = jax.random.split(key, 3)

    batch = 8
    descriptor_dim = 32
    hidden_dims = [64, 32]
    output_dim = 16

    descriptors = jax.random.normal(k_desc, (batch, descriptor_dim), jnp.float32)
    dosage = jax.random.uniform(k_dose, (batch, 1), jnp.float32)

    # input_dim = descriptor_dim + 1 because of the dosage concat
    layers = init_encoder_params(k_params, descriptor_dim + 1, hidden_dims,
                                 output_dim, normalize=True)
    packed = pack_params(layers, descriptor_dim)

    out = integrated_molecular_encoder(descriptors, dosage, packed)
    out = jax.block_until_ready(out)

    assert out.shape == (batch, output_dim), out.shape
    assert out.dtype == jnp.float32

    # Pure-JAX reference: concat -> [Linear -> BN(eval) -> ReLU -> Dropout(id)]*
    # -> Linear, mirroring the kernel's bf16 MXU feed (weights + activations
    # cast to bf16, f32 accumulation, f32 epilogue).
    h = jnp.concatenate([descriptors, dosage], axis=1)
    for l in layers:
        w_fold = (l["w"] * l["scale"][None, :]).astype(jnp.bfloat16)
        s_fold = l["b"] * l["scale"] + l["shift"]
        h = jnp.dot(h.astype(jnp.bfloat16), w_fold,
                    preferred_element_type=jnp.float32) + s_fold[None, :]
        if l["relu"]:
            h = jnp.maximum(h, 0.0)
    max_err = float(jnp.max(jnp.abs(out - h)))
    assert jnp.allclose(out, h, atol=2e-2, rtol=2e-2), f"mismatch: {max_err}"

    print("KERNEL_OK")
</pallas_src>

<mosaic_0001>
module attributes {stable_mosaic.version = 11 : i64} {
  func.func @_fused_mlp_kernel(%arg0: i32, %arg1: memref<8x32xf32, #tpu.memory_space<vmem>>, %arg2: memref<8x1xf32, #tpu.memory_space<vmem>>, %arg3: memref<32x128xbf16, #tpu.memory_space<vmem>>, %arg4: memref<1x128xbf16, #tpu.memory_space<vmem>>, %arg5: memref<1x128xf32, #tpu.memory_space<vmem>>, %arg6: memref<128x128xbf16, #tpu.memory_space<vmem>>, %arg7: memref<1x128xf32, #tpu.memory_space<vmem>>, %arg8: memref<128x16xbf16, #tpu.memory_space<vmem>>, %arg9: memref<1x16xf32, #tpu.memory_space<vmem>>, %arg10: memref<8x16xf32, #tpu.memory_space<vmem>>) attributes {dimension_semantics = [#tpu.dimension_semantics<parallel>], iteration_bounds = array<i64: 1>, scalar_prefetch = 0 : i64, scratch_operands = 0 : i64, tpu.core_type = #tpu.core_type<tc>, window_params = [{transform_indices = @transform_0, window_bounds = array<i64: 8, 32>}, {transform_indices = @transform_1, window_bounds = array<i64: 8, 1>}, {pipeline_mode = #tpu.pipeline_mode<synchronous>, transform_indices = @transform_2, window_bounds = array<i64: 32, 128>}, {pipeline_mode = #tpu.pipeline_mode<synchronous>, transform_indices = @transform_3, window_bounds = array<i64: 1, 128>}, {pipeline_mode = #tpu.pipeline_mode<synchronous>, transform_indices = @transform_4, window_bounds = array<i64: 1, 128>}, {pipeline_mode = #tpu.pipeline_mode<synchronous>, transform_indices = @transform_5, window_bounds = array<i64: 128, 128>}, {pipeline_mode = #tpu.pipeline_mode<synchronous>, transform_indices = @transform_6, window_bounds = array<i64: 1, 128>}, {pipeline_mode = #tpu.pipeline_mode<synchronous>, transform_indices = @transform_7, window_bounds = array<i64: 128, 16>}, {pipeline_mode = #tpu.pipeline_mode<synchronous>, transform_indices = @transform_8, window_bounds = array<i64: 1, 16>}, {transform_indices = @transform_9, window_bounds = array<i64: 8, 16>}]} {
    %c0 = arith.constant 0 : index
    %c0_0 = arith.constant 0 : index
    %0 = vector.load %arg1[%c0, %c0_0] : memref<8x32xf32, #tpu.memory_space<vmem>>, vector<8x32xf32>
    %1 = arith.truncf %0 : vector<8x32xf32> to vector<8x32xbf16>
    %c0_1 = arith.constant 0 : index
    %c0_2 = arith.constant 0 : index
    %2 = vector.load %arg3[%c0_1, %c0_2] : memref<32x128xbf16, #tpu.memory_space<vmem>>, vector<32x128xbf16>
    %cst = arith.constant dense<0.000000e+00> : vector<8x128xf32>
    %3 = tpu.matmul %1, %2, %cst {dimension_numbers = #tpu.dot_dimension_numbers<[1], [0], [0], [1], [0, 0, 1, 1], [], []>} : vector<8x32xbf16>, vector<32x128xbf16>, vector<8x128xf32> -> vector<8x128xf32>
    %c0_3 = arith.constant 0 : index
    %c0_4 = arith.constant 0 : index
    %4 = vector.load %arg2[%c0_3, %c0_4] : memref<8x1xf32, #tpu.memory_space<vmem>>, vector<8x1xf32>
    %c0_5 = arith.constant 0 : index
    %c0_6 = arith.constant 0 : index
    %5 = vector.load %arg4[%c0_5, %c0_6] : memref<1x128xbf16, #tpu.memory_space<vmem>>, vector<1x128xbf16>
    %6 = arith.extf %5 : vector<1x128xbf16> to vector<1x128xf32>
    %7 = vector.broadcast %4 : vector<8x1xf32> to vector<8x128xf32>
    %8 = vector.broadcast %6 : vector<1x128xf32> to vector<8x128xf32>
    %9 = arith.mulf %7, %8 : vector<8x128xf32>
    %10 = arith.addf %3, %9 : vector<8x128xf32>
    %c0_7 = arith.constant 0 : index
    %c0_8 = arith.constant 0 : index
    %11 = vector.load %arg5[%c0_7, %c0_8] : memref<1x128xf32, #tpu.memory_space<vmem>>, vector<1x128xf32>
    %12 = vector.broadcast %11 : vector<1x128xf32> to vector<8x128xf32>
    %13 = arith.addf %10, %12 : vector<8x128xf32>
    %cst_9 = arith.constant 0.000000e+00 : f32
    %14 = vector.broadcast %cst_9 : f32 to vector<8x128xf32>
    %15 = arith.maximumf %13, %14 : vector<8x128xf32>
    %16 = arith.truncf %15 : vector<8x128xf32> to vector<8x128xbf16>
    %c0_10 = arith.constant 0 : index
    %c0_11 = arith.constant 0 : index
    %17 = vector.load %arg6[%c0_10, %c0_11] : memref<128x128xbf16, #tpu.memory_space<vmem>>, vector<128x128xbf16>
    %cst_12 = arith.constant dense<0.000000e+00> : vector<8x128xf32>
    %18 = tpu.matmul %16, %17, %cst_12 {dimension_numbers = #tpu.dot_dimension_numbers<[1], [0], [0], [1], [0, 0, 1, 1], [], []>} : vector<8x128xbf16>, vector<128x128xbf16>, vector<8x128xf32> -> vector<8x128xf32>
    %c0_13 = arith.constant 0 : index
    %c0_14 = arith.constant 0 : index
    %19 = vector.load %arg7[%c0_13, %c0_14] : memref<1x128xf32, #tpu.memory_space<vmem>>, vector<1x128xf32>
    %20 = vector.broadcast %19 : vector<1x128xf32> to vector<8x128xf32>
    %21 = arith.addf %18, %20 : vector<8x128xf32>
    %cst_15 = arith.constant 0.000000e+00 : f32
    %22 = vector.broadcast %cst_15 : f32 to vector<8x128xf32>
    %23 = arith.maximumf %21, %22 : vector<8x128xf32>
    %24 = arith.truncf %23 : vector<8x128xf32> to vector<8x128xbf16>
    %c0_16 = arith.constant 0 : index
    %c0_17 = arith.constant 0 : index
    %25 = vector.load %arg8[%c0_16, %c0_17] : memref<128x16xbf16, #tpu.memory_space<vmem>>, vector<128x16xbf16>
    %cst_18 = arith.constant dense<0.000000e+00> : vector<8x16xf32>
    %26 = tpu.matmul %24, %25, %cst_18 {dimension_numbers = #tpu.dot_dimension_numbers<[1], [0], [0], [1], [0, 0, 1, 1], [], []>} : vector<8x128xbf16>, vector<128x16xbf16>, vector<8x16xf32> -> vector<8x16xf32>
    %c0_19 = arith.constant 0 : index
    %c0_20 = arith.constant 0 : index
    %27 = vector.load %arg9[%c0_19, %c0_20] : memref<1x16xf32, #tpu.memory_space<vmem>>, vector<1x16xf32>
    %28 = vector.broadcast %27 : vector<1x16xf32> to vector<8x16xf32>
    %29 = arith.addf %26, %28 : vector<8x16xf32>
    %c0_21 = arith.constant 0 : index
    %c0_22 = arith.constant 0 : index
    %30 = vector.load %arg10[%c0_21, %c0_22] : memref<8x16xf32, #tpu.memory_space<vmem>>, vector<8x16xf32>
    tpu.vector_store %arg10[%c0_21, %c0_22], %29 {strides = array<i32>} : memref<8x16xf32, #tpu.memory_space<vmem>>, vector<8x16xf32>,
    return
  }
  func.func @transform_0(%arg0: i32) -> (i32, i32) {
    %c0_i32 = arith.constant 0 : i32
    %c0_i32_0 = arith.constant 0 : i32
    return %arg0, %c0_i32 : i32, i32
  }
  func.func @transform_1(%arg0: i32) -> (i32, i32) {
    %c0_i32 = arith.constant 0 : i32
    %c0_i32_0 = arith.constant 0 : i32
    return %arg0, %c0_i32 : i32, i32
  }
  func.func @transform_2(%arg0: i32) -> (i32, i32) {
    %c0_i32 = arith.constant 0 : i32
    %c0_i32_0 = arith.constant 0 : i32
    %c0_i32_1 = arith.constant 0 : i32
    return %c0_i32, %c0_i32_0 : i32, i32
  }
  func.func @transform_3(%arg0: i32) -> (i32, i32) {
    %c0_i32 = arith.constant 0 : i32
    %c0_i32_0 = arith.constant 0 : i32
    %c0_i32_1 = arith.constant 0 : i32
    return %c0_i32, %c0_i32_0 : i32, i32
  }
  func.func @transform_4(%arg0: i32) -> (i32, i32) {
    %c0_i32 = arith.constant 0 : i32
    %c0_i32_0 = arith.constant 0 : i32
    %c0_i32_1 = arith.constant 0 : i32
    return %c0_i32, %c0_i32_0 : i32, i32
  }
  func.func @transform_5(%arg0: i32) -> (i32, i32) {
    %c0_i32 = arith.constant 0 : i32
    %c0_i32_0 = arith.constant 0 : i32
    %c0_i32_1 = arith.constant 0 : i32
    return %c0_i32, %c0_i32_0 : i32, i32
  }
  func.func @transform_6(%arg0: i32) -> (i32, i32) {
    %c0_i32 = arith.constant 0 : i32
    %c0_i32_0 = arith.constant 0 : i32
    %c0_i32_1 = arith.constant 0 : i32
    return %c0_i32, %c0_i32_0 : i32, i32
  }
  func.func @transform_7(%arg0: i32) -> (i32, i32) {
    %c0_i32 = arith.constant 0 : i32
    %c0_i32_0 = arith.constant 0 : i32
    %c0_i32_1 = arith.constant 0 : i32
    return %c0_i32, %c0_i32_0 : i32, i32
  }
  func.func @transform_8(%arg0: i32) -> (i32, i32) {
    %c0_i32 = arith.constant 0 : i32
    %c0_i32_0 = arith.constant 0 : i32
    %c0_i32_1 = arith.constant 0 : i32
    return %c0_i32, %c0_i32_0 : i32, i32
  }
  func.func @transform_9(%arg0: i32) -> (i32, i32) {
    %c0_i32 = arith.constant 0 : i32
    %c0_i32_0 = arith.constant 0 : i32
    return %arg0, %c0_i32 : i32, i32
  }
}

</mosaic_0001>

<llo_original>
// kernel: tpu_custom_call.1
$region0: #{tpu_custom_call.1}
  #allocation0 [shape = 'u32[]', space=smem, size = 0x4, offset = 0x4, fixed_abs, tag = 'smem constant byte address 0x4 - core index']
  #allocation1 [shape = 'u32[144,128]{1,0:T(1,128)}', space=vmem, size = 0x12000, scoped, tag = 'internal scratch']
  %s0 = inlined_call_operand.vmem [shape: f32[8,32], index: 0, kind: input, shape index: {}]
  %s1 = inlined_call_operand.vmem [shape: f32[8,1], index: 1, kind: input, shape index: {}]
  %s2 = inlined_call_operand.vmem [shape: bf16[32,128], index: 2, kind: input, shape index: {}]
  %s3 = inlined_call_operand.vmem [shape: bf16[1,128], index: 3, kind: input, shape index: {}]
  %s4 = inlined_call_operand.vmem [shape: f32[1,128], index: 4, kind: input, shape index: {}]
  %s5 = inlined_call_operand.vmem [shape: bf16[128,128], index: 5, kind: input, shape index: {}]
  %s6 = inlined_call_operand.vmem [shape: f32[1,128], index: 6, kind: input, shape index: {}]
  %s7 = inlined_call_operand.vmem [shape: bf16[128,16], index: 7, kind: input, shape index: {}]
  %s8 = inlined_call_operand.vmem [shape: f32[1,16], index: 8, kind: input, shape index: {}]
  %s9 = inlined_call_operand.hbm [shape: f32[8,16], index: 9, kind: output, shape index: {}]
  %s10 = sld [smem:[#allocation0]]
  $region46: #{tpu_custom_call.1} parent=0
    _
  %s12 = ssub.s32 1, %s10
  %s13 = scalar_select 0, %s12, %s10
  $region1: #{tpu_custom_call.1} parent=0
    #allocation2 [shape = 'u8[4096]{0}', space=vmem, size = 0x1000, scoped, tag = 'output window, operand 0, single buffered']
    #allocation3 [shape = 's32[1]{0}', space=sflag, size = 0x4, scoped, tag = 'scoped memory for tpu_custom_call.1']
    %14 = vsyncpa [#allocation3], 0
    // Predicated region
    $region2: #{tpu_custom_call.1} parent=1 // pred_check
      _
    $region3: #{tpu_custom_call.1} parent=1 // pred_check_branch
      %16 = sbr.rel (0) target = $region5
    $region4: #{tpu_custom_call.1} parent=1 // pred_region
      _
    $region5: #{tpu_custom_call.1} parent=1 // pred_fallthru
      _
    // Predicated region
    $region6: #{tpu_custom_call.1} parent=1 // pred_check
      _
    $region7: #{tpu_custom_call.1} parent=1 // pred_check_branch
      %18 = sbr.rel (0) target = $region9
    $region8: #{tpu_custom_call.1} parent=1 // pred_region
      _
    $region9: #{tpu_custom_call.1} parent=1 // pred_fallthru
      _
    // Predicated region
    $region10: #{tpu_custom_call.1} parent=1 // pred_check
      _
    $region11: #{tpu_custom_call.1} parent=1 // pred_check_branch
      %20 = sbr.rel (0) target = $region13
    $region12: #{tpu_custom_call.1} parent=1 // pred_region
      _
    $region13: #{tpu_custom_call.1} parent=1 // pred_fallthru
      _
    // Predicated region
    $region14: #{tpu_custom_call.1} parent=1 // pred_check
      _
    $region15: #{tpu_custom_call.1} parent=1 // pred_check_branch
      %22 = sbr.rel (0) target = $region17
    $region16: #{tpu_custom_call.1} parent=1 // pred_region
      _
    $region17: #{tpu_custom_call.1} parent=1 // pred_fallthru
      _
    // Predicated region
    $region18: #{tpu_custom_call.1} parent=1 // pred_check
      _
    $region19: #{tpu_custom_call.1} parent=1 // pred_check_branch
      %24 = sbr.rel (0) target = $region21
    $region20: #{tpu_custom_call.1} parent=1 // pred_region
      _
    $region21: #{tpu_custom_call.1} parent=1 // pred_fallthru
      _
    // Predicated region
    $region22: #{tpu_custom_call.1} parent=1 // pred_check
      _
    $region23: #{tpu_custom_call.1} parent=1 // pred_check_branch
      %26 = sbr.rel (0) target = $region25
    $region24: #{tpu_custom_call.1} parent=1 // pred_region
      _
    $region25: #{tpu_custom_call.1} parent=1 // pred_fallthru
      _
    // Predicated region
    $region26: #{tpu_custom_call.1} parent=1 // pred_check
      _
    $region27: #{tpu_custom_call.1} parent=1 // pred_check_branch
      %28 = sbr.rel (0) target = $region29
    $region28: #{tpu_custom_call.1} parent=1 // pred_region
      _
    $region29: #{tpu_custom_call.1} parent=1 // pred_fallthru
      _
    // Predicated region
    $region30: #{tpu_custom_call.1} parent=1 // pred_check
      _
    $region31: #{tpu_custom_call.1} parent=1 // pred_check_branch
      %30 = sbr.rel (0) target = $region33
    $region32: #{tpu_custom_call.1} parent=1 // pred_region
      _
    $region33: #{tpu_custom_call.1} parent=1 // pred_fallthru
      _
    // Predicated region
    $region34: #{tpu_custom_call.1} parent=1 // pred_check
      _
    $region35: #{tpu_custom_call.1} parent=1 // pred_check_branch
      %32 = sbr.rel (0) target = $region37
    $region36: #{tpu_custom_call.1} parent=1 // pred_region
      _
    $region37: #{tpu_custom_call.1} parent=1 // pred_fallthru
      _
    %v34 = vld [vmem:[%s0] sm:$0xff]
    %v35 = vpack.c.bf16 %v34, %v34
    %v36 = vld [vmem:[%s2] sm:$0xf]
    %v37 = vld [vmem:[%s2 + $0x4] sm:$0xf]
    %v38 = vld [vmem:[%s2 + $0x8] sm:$0xf]
    %v39 = vld [vmem:[%s2 + $0xc] sm:$0xf]
    %v40 = vld [vmem:[%s1] sm:$0xff]
    %v41 = vld [vmem:[%s3] sm:$0x1]
    %v42 = vunpack.c.l.bf16 %v41
    %44 = vset.pattern.permute.xlu0 0
    %45 = vperm.xlu0 %44, %v40
    %v46 = vpop.permute.xlu0 %45
    %v48 = vlaneseq
    %v49 = vshrl.u32 %v48, 7
    %v50 = vsub.s32 0, %v49
    %v51 = vrot.slane %v42, %v50
    %v52 = vmul.f32 %v46, %v51
    %v57 = vunpack.c.l.b16 %v36
    %v58 = vunpack.c.l.b16 %v37
    %v59 = vunpack.c.l.b16 %v38
    %v60 = vunpack.c.l.b16 %v39
    %v61 = vpack.c.b16 %v58, %v57
    %v62 = vpack.c.b16 %v60, %v59
    %vm65 = vcmask 261120
    %v67 = vsel %vm65, %v35, 0
    %69 = vmatprep.subr.bf16.mxu0 0
    %70 = vmatpush1.bf16.msra.mxu0 0
    %71 = vmatprep.subr.bf16.mxu0 0
    %72 = vmatpush1.bf16.msra.mxu0 0
    %73 = vmatprep.subr.bf16.mxu0 0
    %74 = vmatpush1.bf16.msra.mxu0 0
    %75 = vmatprep.subr.bf16.mxu0 0
    %76 = vmatpush1.bf16.msra.mxu0 0
    %77 = vmatprep.subr.bf16.mxu0 0
    %78 = vmatpush1.bf16.msra.mxu0 0
    %79 = vmatprep.subr.bf16.mxu0 0
    %80 = vmatpush1.bf16.msra.mxu0 0
    %81 = vmatprep.subr.bf16.mxu0 0
    %82 = vmatpush1.bf16.msra.mxu0 %v62
    %83 = vmatprep.subr.bf16.mxu0 0
    %84 = vmatpush1.bf16.msra.mxu0 %v61
    %85 = vmatprep.subr.bf16.mxu0 0
    %86 = vmatpush2.bf16.msra.mxu0 0
    %87 = vmatprep.subr.bf16.mxu0 0
    %88 = vmatpush2.bf16.msra.mxu0 0
    %89 = vmatprep.subr.bf16.mxu0 0
    %90 = vmatpush2.bf16.msra.mxu0 0
    %91 = vmatprep.subr.bf16.mxu0 0
    %92 = vmatpush2.bf16.msra.mxu0 0
    %93 = vmatprep.subr.bf16.mxu0 0
    %94 = vmatpush2.bf16.msra.mxu0 0
    %95 = vmatprep.subr.bf16.mxu0 0
    %96 = vmatpush2.bf16.msra.mxu0 0
    %97 = vmatprep.subr.bf16.mxu0 0
    %98 = vmatpush2.bf16.msra.mxu0 0
    %99 = vmatprep.subr.bf16.mxu0 0
    %100 = vmatpush2.bf16.msra.mxu0 0
    %101 = vmatprep.mubr.bf16.mxu0 0
    %102 = vmatmul.mubr.bf16.gmra.mxu0 %v67
    %v103 = vpop.f32.mrf.mxu0
    %v104 = vadd.f32 %v52, %v103
    %v105 = vpop.f32.mrf.mxu0
    %v106 = vpop.f32.mrf.mxu0
    %v107 = vpop.f32.mrf.mxu0
    %108 = vdwg.mxu0
    %v109 = vld [vmem:[%s4] sm:$0x1]
    %v111 = vlaneseq
    %v112 = vshrl.u32 %v111, 7
    %v113 = vsub.s32 0, %v112
    %v114 = vrot.slane %v109, %v113
    %v116 = vadd.f32 %v104, %v114
    %v117 = vmax.f32 %v116, 0.0
    %v118 = vpack.c.bf16 %v117, %v117
    %v119 = vld [vmem:[%s5] sm:$0xf]
    %v120 = vld [vmem:[%s5 + $0x4] sm:$0xf]
    %v121 = vld [vmem:[%s5 + $0x8] sm:$0xf]
    %v122 = vld [vmem:[%s5 + $0xc] sm:$0xf]
    %v123 = vld [vmem:[%s5 + $0x10] sm:$0xf]
    %v124 = vld [vmem:[%s5 + $0x14] sm:$0xf]
    %v125 = vld [vmem:[%s5 + $0x18] sm:$0xf]
    %v126 = vld [vmem:[%s5 + $0x1c] sm:$0xf]
    %v127 = vld [vmem:[%s5 + $0x20] sm:$0xf]
    %v128 = vld [vmem:[%s5 + $0x24] sm:$0xf]
    %v129 = vld [vmem:[%s5 + $0x28] sm:$0xf]
    %v130 = vld [vmem:[%s5 + $0x2c] sm:$0xf]
    %v131 = vld [vmem:[%s5 + $0x30] sm:$0xf]
    %v132 = vld [vmem:[%s5 + $0x34] sm:$0xf]
    %v133 = vld [vmem:[%s5 + $0x38] sm:$0xf]
    %v134 = vld [vmem:[%s5 + $0x3c] sm:$0xf]
    %v135 = vld [vmem:[%s6] sm:$0x1]
    %v137 = vlaneseq
    %v138 = vshrl.u32 %v137, 7
    %v139 = vsub.s32 0, %v138
    %v140 = vrot.slane %v135, %v139
    %v158 = vunpack.c.l.b16 %v119
    %v159 = vunpack.c.l.b16 %v120
    %v160 = vunpack.c.l.b16 %v121
    %v161 = vunpack.c.l.b16 %v122
    %v162 = vunpack.c.l.b16 %v123
    %v163 = vunpack.c.l.b16 %v124
    %v164 = vunpack.c.l.b16 %v125
    %v165 = vunpack.c.l.b16 %v126
    %v166 = vunpack.c.l.b16 %v127
    %v167 = vunpack.c.l.b16 %v128
    %v168 = vunpack.c.l.b16 %v129
    %v169 = vunpack.c.l.b16 %v130
    %v170 = vunpack.c.l.b16 %v131
    %v171 = vunpack.c.l.b16 %v132
    %v172 = vunpack.c.l.b16 %v133
    %v173 = vunpack.c.l.b16 %v134
    %v174 = vpack.c.b16 %v159, %v158
    %v175 = vpack.c.b16 %v161, %v160
    %v176 = vpack.c.b16 %v163, %v162
    %v177 = vpack.c.b16 %v165, %v164
    %v178 = vpack.c.b16 %v167, %v166
    %v179 = vpack.c.b16 %v169, %v168
    %v180 = vpack.c.b16 %v171, %v170
    %v181 = vpack.c.b16 %v173, %v172
    %190 = vmatprep.subr.bf16.mxu0 0
    %191 = vmatpush1.bf16.msra.mxu0 %v181
    %192 = vmatprep.subr.bf16.mxu0 0
    %193 = vmatpush1.bf16.msra.mxu0 %v180
    %194 = vmatprep.subr.bf16.mxu0 0
    %195 = vmatpush1.bf16.msra.mxu0 %v179
    %196 = vmatprep.subr.bf16.mxu0 0
    %197 = vmatpush1.bf16.msra.mxu0 %v178
    %198 = vmatprep.subr.bf16.mxu0 0
    %199 = vmatpush1.bf16.msra.mxu0 %v177
    %200 = vmatprep.subr.bf16.mxu0 0
    %201 = vmatpush1.bf16.msra.mxu0 %v176
    %202 = vmatprep.subr.bf16.mxu0 0
    %203 = vmatpush1.bf16.msra.mxu0 %v175
    %204 = vmatprep.subr.bf16.mxu0 0
    %205 = vmatpush1.bf16.msra.mxu0 %v174
    %206 = vmatprep.subr.bf16.mxu0 0
    %207 = vmatpush2.bf16.msra.mxu0 0
    %208 = vmatprep.subr.bf16.mxu0 0
    %209 = vmatpush2.bf16.msra.mxu0 0
    %210 = vmatprep.subr.bf16.mxu0 0
    %211 = vmatpush2.bf16.msra.mxu0 0
    %212 = vmatprep.subr.bf16.mxu0 0
    %213 = vmatpush2.bf16.msra.mxu0 0
    %214 = vmatprep.subr.bf16.mxu0 0
    %215 = vmatpush2.bf16.msra.mxu0 0
    %216 = vmatprep.subr.bf16.mxu0 0
    %217 = vmatpush2.bf16.msra.mxu0 0
    %218 = vmatprep.subr.bf16.mxu0 0
    %219 = vmatpush2.bf16.msra.mxu0 0
    %220 = vmatprep.subr.bf16.mxu0 0
    %221 = vmatpush2.bf16.msra.mxu0 0
    %222 = vmatprep.mubr.bf16.mxu0 0
    %223 = vmatmul.mubr.bf16.gmra.mxu0 %v118
    %v224 = vpop.f32.mrf.mxu0
    %v225 = vadd.f32 %v140, %v224
    %v226 = vpop.f32.mrf.mxu0
    %v227 = vpop.f32.mrf.mxu0
    %v228 = vpop.f32.mrf.mxu0
    %229 = vdwg.mxu0
    %v230 = vmax.f32 %v225, 0.0
    %v231 = vpack.c.bf16 %v230, %v230
    %v232 = vld [vmem:[%s7] sm:$0xf]
    %v233 = vld [vmem:[%s7 + $0x4] sm:$0xf]
    %v234 = vld [vmem:[%s7 + $0x8] sm:$0xf]
    %v235 = vld [vmem:[%s7 + $0xc] sm:$0xf]
    %v236 = vld [vmem:[%s7 + $0x10] sm:$0xf]
    %v237 = vld [vmem:[%s7 + $0x14] sm:$0xf]
    %v238 = vld [vmem:[%s7 + $0x18] sm:$0xf]
    %v239 = vld [vmem:[%s7 + $0x1c] sm:$0xf]
    %v240 = vld [vmem:[%s7 + $0x20] sm:$0xf]
    %v241 = vld [vmem:[%s7 + $0x24] sm:$0xf]
    %v242 = vld [vmem:[%s7 + $0x28] sm:$0xf]
    %v243 = vld [vmem:[%s7 + $0x2c] sm:$0xf]
    %v244 = vld [vmem:[%s7 + $0x30] sm:$0xf]
    %v245 = vld [vmem:[%s7 + $0x34] sm:$0xf]
    %v246 = vld [vmem:[%s7 + $0x38] sm:$0xf]
    %v247 = vld [vmem:[%s7 + $0x3c] sm:$0xf]
    %v248 = vld [vmem:[%s8] sm:$0x1]
    %v250 = vlaneseq
    %v251 = vshrl.u32 %v250, 7
    %v252 = vsub.s32 0, %v251
    %v253 = vrot.slane %v248, %v252
    %v271 = vunpack.c.l.b16 %v232
    %v272 = vunpack.c.l.b16 %v233
    %v273 = vunpack.c.l.b16 %v234
    %v274 = vunpack.c.l.b16 %v235
    %v275 = vunpack.c.l.b16 %v236
    %v276 = vunpack.c.l.b16 %v237
    %v277 = vunpack.c.l.b16 %v238
    %v278 = vunpack.c.l.b16 %v239
    %v279 = vunpack.c.l.b16 %v240
    %v280 = vunpack.c.l.b16 %v241
    %v281 = vunpack.c.l.b16 %v242
    %v282 = vunpack.c.l.b16 %v243
    %v283 = vunpack.c.l.b16 %v244
    %v284 = vunpack.c.l.b16 %v245
    %v285 = vunpack.c.l.b16 %v246
    %v286 = vunpack.c.l.b16 %v247
    %v287 = vpack.c.b16 %v272, %v271
    %v288 = vpack.c.b16 %v274, %v273
    %v289 = vpack.c.b16 %v276, %v275
    %v290 = vpack.c.b16 %v278, %v277
    %v291 = vpack.c.b16 %v280, %v279
    %v292 = vpack.c.b16 %v282, %v281
    %v293 = vpack.c.b16 %v284, %v283
    %v294 = vpack.c.b16 %v286, %v285
    %303 = vmatprep.subr.bf16.mxu0 0
    %304 = vmatpush1.bf16.msra.mxu0 %v294
    %305 = vmatprep.subr.bf16.mxu0 0
    %306 = vmatpush1.bf16.msra.mxu0 %v293
    %307 = vmatprep.subr.bf16.mxu0 0
    %308 = vmatpush1.bf16.msra.mxu0 %v292
    %309 = vmatprep.subr.bf16.mxu0 0
    %310 = vmatpush1.bf16.msra.mxu0 %v291
    %311 = vmatprep.subr.bf16.mxu0 0
    %312 = vmatpush1.bf16.msra.mxu0 %v290
    %313 = vmatprep.subr.bf16.mxu0 0
    %314 = vmatpush1.bf16.msra.mxu0 %v289
    %315 = vmatprep.subr.bf16.mxu0 0
    %316 = vmatpush1.bf16.msra.mxu0 %v288
    %317 = vmatprep.subr.bf16.mxu0 0
    %318 = vmatpush1.bf16.msra.mxu0 %v287
    %319 = vmatprep.subr.bf16.mxu0 0
    %320 = vmatpush2.bf16.msra.mxu0 0
    %321 = vmatprep.subr.bf16.mxu0 0
    %322 = vmatpush2.bf16.msra.mxu0 0
    %323 = vmatprep.subr.bf16.mxu0 0
    %324 = vmatpush2.bf16.msra.mxu0 0
    %325 = vmatprep.subr.bf16.mxu0 0
    %326 = vmatpush2.bf16.msra.mxu0 0
    %327 = vmatprep.subr.bf16.mxu0 0
    %328 = vmatpush2.bf16.msra.mxu0 0
    %329 = vmatprep.subr.bf16.mxu0 0
    %330 = vmatpush2.bf16.msra.mxu0 0
    %331 = vmatprep.subr.bf16.mxu0 0
    %332 = vmatpush2.bf16.msra.mxu0 0
    %333 = vmatprep.subr.bf16.mxu0 0
    %334 = vmatpush2.bf16.msra.mxu0 0
    %335 = vmatprep.mubr.bf16.mxu0 0
    %336 = vmatmul.mubr.bf16.gmra.mxu0 %v231
    %v337 = vpop.f32.mrf.mxu0
    %v338 = vadd.f32 %v253, %v337
    %v339 = vpop.f32.mrf.mxu0
    %v340 = vpop.f32.mrf.mxu0
    %v341 = vpop.f32.mrf.mxu0
    %342 = vdwg.mxu0
    %vm343 = vcmask 130048
    %344 = vst.msk [vmem:[#allocation2] sm:$0xff] %vm343, %v338
    // Predicated region
    $region38: #{tpu_custom_call.1} parent=1 // pred_check
      _
    $region39: #{tpu_custom_call.1} parent=1 // pred_check_branch
      %346 = sbr.rel (0) target = $region41
    $region40: #{tpu_custom_call.1} parent=1 // pred_region
      %s348 = ssub.s32 128, 128
      %349 = vsyncadd [#allocation3], %s348
      %s351 = sshll.u32 [#allocation2], 4
      %s352 = int_to_ptr.vmem [resolvable:$true] %s351
      %354 = dma.vmem_to_hbm [thread:$0]  %s352, 128, %s9, [#allocation3]
    $region41: #{tpu_custom_call.1} parent=1 // pred_fallthru
      _
    // Predicated region
    $region42: #{tpu_custom_call.1} parent=1 // pred_check
      _
    $region43: #{tpu_custom_call.1} parent=1 // pred_check_branch
      %356 = sbr.rel (0) target = $region45
    $region44: #{tpu_custom_call.1} parent=1 // pred_region
      %357 = dma.done [#allocation3], 128
    $region45: #{tpu_custom_call.1} parent=1 // pred_fallthru
      _
    %358 = vsyncpa [#allocation3], 1

</llo_original>
